<compile_context>
chip_gen: v6e
topology: v6e:2x2x1
jax: 0.10.0
libtpu: 0.0.40
codegen_flags: <defaults>
</compile_context>

<pallas_src>
import jax
import jax.numpy as jnp
from jax.experimental import pallas as pl
from jax.experimental.pallas import tpu as pltpu


def _round_up(x: int, m: int) -> int:
    return ((x + m - 1) // m) * m


def _make_focal_loss_kernel(alpha: float, gamma: float, tile_n: int, n_valid: int):
    gamma_is_int = float(gamma) == float(int(gamma)) and gamma >= 0
    gamma_int = int(gamma)

    def focal_loss_kernel(logits_ref, targets_ref, out_ref):
        i = pl.program_id(0)
        x = logits_ref[...].astype(jnp.float32)          # (TN, C)
        t = targets_ref[...]                             # (TN, 1) int32
        tn, c = x.shape

        # --- numerically stable softmax pieces (reused for ce AND p_t) ------
        m = jnp.max(x, axis=-1, keepdims=True)                         # (TN, 1)
        e = jnp.exp(x - m)                                             # (TN, C)  EUP
        s = jnp.sum(e, axis=-1, keepdims=True)                         # (TN, 1)

        cls_ids = jax.lax.broadcasted_iota(jnp.int32, (tn, c), 1)      # (TN, C)
        onehot = cls_ids == t                                          # (TN, C)
        x_tgt = jnp.sum(jnp.where(onehot, x, 0.0), axis=-1, keepdims=True)  # (TN, 1)
        e_tgt = jnp.sum(jnp.where(onehot, e, 0.0), axis=-1, keepdims=True)  # (TN, 1)

        # cross entropy (reduction='none'), clamped against fp-rounding negatives
        ce = jnp.maximum(m + jnp.log(s) - x_tgt, 0.0)                  # (TN, 1)

        # p_t = softmax prob of target class, reusing e/s (no extra exp); <= 1
        p_t = e_tgt / s                                                # (TN, 1)
        q = 1.0 - p_t

        # --- focal weight: avoid float-exponent pow for integer gamma -------
        if gamma_is_int:
            w = jnp.ones_like(q)
            for _ in range(gamma_int):
                w = w * q
        else:
            w = jnp.power(jnp.maximum(q, 0.0), gamma)

        focal = alpha * w * ce                                         # (TN, 1)

        # --- mask padded rows (N not a multiple of TN) -----------------------
        row_ids = i * tile_n + jax.lax.broadcasted_iota(jnp.int32, (tn, 1), 0)
        focal = jnp.where(row_ids < n_valid, focal, 0.0)

        # --- per-tile partial sum, lane-dense output block -------------------
        partial = jnp.sum(focal).reshape(1, 1, 1)
        out_ref[...] = jnp.broadcast_to(partial, out_ref.shape)        # (1, 8, 128)

    return focal_loss_kernel


def focal_loss(logits, targets, alpha: float = 1.0, gamma: float = 2.0,
               reduction: str = "mean", tile_n: int = 512):
    """Pallas TPU focal loss. logits: (N, C) float32, targets: (N,) int32.

    tile_n=512 keeps the double-buffered (TN, C) logits tile + padded (TN, 128)
    targets tile comfortably under the default scoped-VMEM limit for moderate C
    on v5e/v6e/v7x; lower tile_n (or raise vmem_limit_bytes) for very large C.
    """
    n, c = logits.shape
    logits = logits.astype(jnp.float32)
    targets_2d = targets.astype(jnp.int32).reshape(n, 1)

    tn = min(int(tile_n), _round_up(n, 8))
    n_pad = _round_up(n, tn)
    if n_pad != n:
        logits = jnp.pad(logits, ((0, n_pad - n), (0, 0)))
        targets_2d = jnp.pad(targets_2d, ((0, n_pad - n), (0, 0)))
    num_tiles = n_pad // tn

    kernel = _make_focal_loss_kernel(float(alpha), float(gamma), tn, n)
    partials = pl.pallas_call(
        kernel,
        out_shape=jax.ShapeDtypeStruct((num_tiles, 8, 128), jnp.float32),
        grid=(num_tiles,),
        in_specs=[
            pl.BlockSpec((tn, c), lambda i: (i, 0)),   # logits tile
            pl.BlockSpec((tn, 1), lambda i: (i, 0)),   # targets tile
        ],
        out_specs=pl.BlockSpec((1, 8, 128), lambda i: (i, 0, 0)),
        compiler_params=pltpu.CompilerParams(
            dimension_semantics=("parallel",),         # independent tiles → megacore on v7x
        ),
    )(logits, targets_2d)

    total = jnp.sum(partials[:, 0, 0])
    if reduction == "mean":
        return total / n
    elif reduction == "sum":
        return total
    # TODO(synk): reduction='none' (per-row output) not implemented in this kernel.
    raise ValueError(f"unsupported reduction: {reduction}")

    # TODO(synk): for very large C (>8-16K classes) add a second grid axis over C
    # with an online-logsumexp carry so per-tile VMEM stays bounded.


def _reference_focal_loss(logits, targets, alpha=1.0, gamma=2.0):
    # pure-JAX reference mirroring the PyTorch module
    lse = jax.scipy.special.logsumexp(logits, axis=-1)
    x_t = jnp.take_along_axis(logits, targets[:, None], axis=-1)[:, 0]
    ce = lse - x_t
    p_t = jnp.exp(-ce)
    focal = alpha * (1.0 - p_t) ** gamma * ce
    return jnp.mean(focal)


if __name__ == "__main__":
    key = jax.random.PRNGKey(0)
    k_logits, k_targets = jax.random.split(key)

    # small shapes consistent with the module: batch=8, num_classes=32
    N, C = 8, 32
    logits = jax.random.normal(k_logits, (N, C), dtype=jnp.float32)
    targets = jax.random.randint(k_targets, (N,), 0, C, dtype=jnp.int32)

    out = focal_loss(logits, targets, alpha=1.0, gamma=2.0)
    out = jax.block_until_ready(out)
    ref = _reference_focal_loss(logits, targets, alpha=1.0, gamma=2.0)
    assert jnp.allclose(out, ref, atol=1e-5, rtol=1e-5), (out, ref)

    # second check: multi-tile grid + row masking (N not a multiple of tile)
    N2 = 20
    k2a, k2b = jax.random.split(jax.random.PRNGKey(1))
    logits2 = jax.random.normal(k2a, (N2, C), dtype=jnp.float32)
    targets2 = jax.random.randint(k2b, (N2,), 0, C, dtype=jnp.int32)
    out2 = jax.block_until_ready(focal_loss(logits2, targets2, tile_n=8))
    ref2 = _reference_focal_loss(logits2, targets2)
    assert jnp.allclose(out2, ref2, atol=1e-5, rtol=1e-5), (out2, ref2)

    print("KERNEL_OK")
</pallas_src>

<mosaic_0001>
module attributes {stable_mosaic.version = 11 : i64} {
  func.func @focal_loss_kernel(%arg0: i32, %arg1: memref<8x32xf32, #tpu.memory_space<vmem>>, %arg2: memref<8x1xi32, #tpu.memory_space<vmem>>, %arg3: memref<1x8x128xf32, #tpu.memory_space<vmem>>) attributes {dimension_semantics = [#tpu.dimension_semantics<parallel>], iteration_bounds = array<i64: 1>, scalar_prefetch = 0 : i64, scratch_operands = 0 : i64, tpu.core_type = #tpu.core_type<tc>, window_params = [{transform_indices = @transform_0, window_bounds = array<i64: 8, 32>}, {transform_indices = @transform_1, window_bounds = array<i64: 8, 1>}, {transform_indices = @transform_2, window_bounds = array<i64: 1, 8, 128>}]} {
    %c0 = arith.constant 0 : index
    %c0_0 = arith.constant 0 : index
    %0 = vector.load %arg1[%c0, %c0_0] : memref<8x32xf32, #tpu.memory_space<vmem>>, vector<8x32xf32>
    %c0_1 = arith.constant 0 : index
    %c0_2 = arith.constant 0 : index
    %1 = vector.load %arg2[%c0_1, %c0_2] : memref<8x1xi32, #tpu.memory_space<vmem>>, vector<8x1xi32>
    %cst = arith.constant dense<0xFF800000> : vector<8xf32>
    %2 = vector.multi_reduction <maximumf>, %0, %cst [1] : vector<8x32xf32> to vector<8xf32>
    %3 = vector.shape_cast %2 : vector<8xf32> to vector<8x1xf32>
    %4 = vector.broadcast %3 : vector<8x1xf32> to vector<8x32xf32>
    %5 = arith.subf %0, %4 : vector<8x32xf32>
    %6 = math.exp %5 : vector<8x32xf32>
    %cst_3 = arith.constant dense<0.000000e+00> : vector<8xf32>
    %7 = vector.multi_reduction <add>, %6, %cst_3 [1] : vector<8x32xf32> to vector<8xf32>
    %8 = vector.shape_cast %7 : vector<8xf32> to vector<8x1xf32>
    %9 = tpu.iota {dimensions = array<i32: 1>} : vector<8x32xi32>
    %10 = vector.broadcast %1 : vector<8x1xi32> to vector<8x32xi32>
    %11 = arith.cmpi eq, %9, %10 : vector<8x32xi32>
    %cst_4 = arith.constant 0.000000e+00 : f32
    %12 = vector.broadcast %cst_4 : f32 to vector<8x32xf32>
    %13 = arith.select %11, %0, %12 : vector<8x32xi1>, vector<8x32xf32>
    %cst_5 = arith.constant dense<0.000000e+00> : vector<8xf32>
    %14 = vector.multi_reduction <add>, %13, %cst_5 [1] : vector<8x32xf32> to vector<8xf32>
    %15 = vector.shape_cast %14 : vector<8xf32> to vector<8x1xf32>
    %cst_6 = arith.constant 0.000000e+00 : f32
    %16 = vector.broadcast %cst_6 : f32 to vector<8x32xf32>
    %17 = arith.select %11, %6, %16 : vector<8x32xi1>, vector<8x32xf32>
    %cst_7 = arith.constant dense<0.000000e+00> : vector<8xf32>
    %18 = vector.multi_reduction <add>, %17, %cst_7 [1] : vector<8x32xf32> to vector<8xf32>
    %19 = vector.shape_cast %18 : vector<8xf32> to vector<8x1xf32>
    %20 = math.log %8 : vector<8x1xf32>
    %21 = arith.addf %3, %20 : vector<8x1xf32>
    %22 = arith.subf %21, %15 : vector<8x1xf32>
    %cst_8 = arith.constant 0.000000e+00 : f32
    %23 = vector.broadcast %cst_8 : f32 to vector<8x1xf32>
    %24 = arith.maximumf %22, %23 : vector<8x1xf32>
    %25 = arith.divf %19, %8 : vector<8x1xf32>
    %cst_9 = arith.constant 1.000000e+00 : f32
    %26 = vector.broadcast %cst_9 : f32 to vector<8x1xf32>
    %27 = arith.subf %26, %25 : vector<8x1xf32>
    %cst_10 = arith.constant 1.000000e+00 : f32
    %28 = vector.broadcast %cst_10 : f32 to vector<8x1xf32>
    %29 = arith.mulf %28, %27 : vector<8x1xf32>
    %30 = arith.mulf %29, %27 : vector<8x1xf32>
    %cst_11 = arith.constant 1.000000e+00 : f32
    %31 = vector.broadcast %cst_11 : f32 to vector<8x1xf32>
    %32 = arith.mulf %31, %30 : vector<8x1xf32>
    %33 = arith.mulf %32, %24 : vector<8x1xf32>
    %c8_i32 = arith.constant 8 : i32
    %34 = arith.muli %arg0, %c8_i32 : i32
    %35 = tpu.iota {dimensions = array<i32: 0>} : vector<8x1xi32>
    %36 = vector.broadcast %34 : i32 to vector<8x1xi32>
    %37 = arith.addi %36, %35 : vector<8x1xi32>
    %c8_i32_12 = arith.constant 8 : i32
    %38 = vector.broadcast %c8_i32_12 : i32 to vector<8x1xi32>
    %39 = arith.cmpi slt, %37, %38 : vector<8x1xi32>
    %cst_13 = arith.constant 0.000000e+00 : f32
    %40 = vector.broadcast %cst_13 : f32 to vector<8x1xf32>
    %41 = arith.select %39, %33, %40 : vector<8x1xi1>, vector<8x1xf32>
    %42 = vector.shape_cast %41 : vector<8x1xf32> to vector<1x8x1xf32>
    %cst_14 = arith.constant dense<0.000000e+00> : vector<1xf32>
    %43 = vector.multi_reduction <add>, %42, %cst_14 [1, 2] : vector<1x8x1xf32> to vector<1xf32>
    %44 = vector.shape_cast %43 : vector<1xf32> to vector<1x1x1xf32>
    %45 = vector.extract %44[0, 0, 0] : f32 from vector<1x1x1xf32>
    %46 = vector.broadcast %45 : f32 to vector<1x1x1xf32>
    %47 = vector.shape_cast %46 : vector<1x1x1xf32> to vector<1x1x1xf32>
    %48 = vector.broadcast %47 : vector<1x1x1xf32> to vector<1x8x128xf32>
    %c0_15 = arith.constant 0 : index
    %c0_16 = arith.constant 0 : index
    %c0_17 = arith.constant 0 : index
    %49 = vector.load %arg3[%c0_15, %c0_16, %c0_17] : memref<1x8x128xf32, #tpu.memory_space<vmem>>, vector<1x8x128xf32>
    tpu.vector_store %arg3[%c0_15, %c0_16, %c0_17], %48 {strides = array<i32>} : memref<1x8x128xf32, #tpu.memory_space<vmem>>, vector<1x8x128xf32>,
    return
  }
  func.func @transform_0(%arg0: i32) -> (i32, i32) {
    %c0_i32 = arith.constant 0 : i32
    %c0_i32_0 = arith.constant 0 : i32
    return %arg0, %c0_i32 : i32, i32
  }
  func.func @transform_1(%arg0: i32) -> (i32, i32) {
    %c0_i32 = arith.constant 0 : i32
    %c0_i32_0 = arith.constant 0 : i32
    return %arg0, %c0_i32 : i32, i32
  }
  func.func @transform_2(%arg0: i32) -> (i32, i32, i32) {
    %c0_i32 = arith.constant 0 : i32
    %c0_i32_0 = arith.constant 0 : i32
    %c0_i32_1 = arith.constant 0 : i32
    return %arg0, %c0_i32, %c0_i32_0 : i32, i32, i32
  }
}

</mosaic_0001>

<llo_original>
// kernel: tpu_custom_call.1
$region0: #{tpu_custom_call.1}
  #allocation0 [shape = 'u32[]', space=smem, size = 0x4, offset = 0x4, fixed_abs, tag = 'smem constant byte address 0x4 - core index']
  #allocation1 [shape = 'u32[144,128]{1,0:T(1,128)}', space=vmem, size = 0x12000, scoped, tag = 'internal scratch']
  %s0 = inlined_call_operand.vmem [shape: f32[8,32], index: 0, kind: input, shape index: {}]
  %s1 = inlined_call_operand.vmem [shape: s32[8,1], index: 1, kind: input, shape index: {}]
  %s2 = inlined_call_operand.hbm [shape: f32[1,8,128], index: 2, kind: output, shape index: {}]
  %s3 = sld [smem:[#allocation0]]
  $region18: #{tpu_custom_call.1} parent=0
    _
  %s5 = ssub.s32 1, %s3
  %s6 = scalar_select 0, %s5, %s3
  $region1: #{tpu_custom_call.1} parent=0
    #allocation2 [shape = 'u8[4096]{0}', space=vmem, size = 0x1000, scoped, tag = 'output window, operand 0, single buffered']
    #allocation3 [shape = 's32[1]{0}', space=sflag, size = 0x4, scoped, tag = 'scoped memory for tpu_custom_call.1']
    %7 = vsyncpa [#allocation3], 0
    // Predicated region
    $region2: #{tpu_custom_call.1} parent=1 // pred_check
      _
    $region3: #{tpu_custom_call.1} parent=1 // pred_check_branch
      %9 = sbr.rel (0) target = $region5
    $region4: #{tpu_custom_call.1} parent=1 // pred_region
      _
    $region5: #{tpu_custom_call.1} parent=1 // pred_fallthru
      _
    // Predicated region
    $region6: #{tpu_custom_call.1} parent=1 // pred_check
      _
    $region7: #{tpu_custom_call.1} parent=1 // pred_check_branch
      %11 = sbr.rel (0) target = $region9
    $region8: #{tpu_custom_call.1} parent=1 // pred_region
      _
    $region9: #{tpu_custom_call.1} parent=1 // pred_fallthru
      _
    %v12 = vld [vmem:[%s0] sm:$0xff]
    %v13 = vld [vmem:[%s1] sm:$0xff]
    %vm14 = vcmask 261120
    %v15 = vsel %vm14, %v12, -inf
    %16 = vmax.xlane.f32.xlu0 %v15
    %v17 = vpop.xlane.xlu0 %16
    %v18 = vsub.f32 %v12, %v17
    %v19 = vmul.f32 %v18, 1.442695
    %v20 = vpow.pop %v19
    %v21 = vsel %vm14, %v20, 0.0
    %22 = vadd.xlane.f32.xlu0 %v21
    %v23 = vpop.xlane.xlu0 %22
    %v24 = vlaneseq
    %v25 = vand.u32 %v24, 127
    %26 = vset.pattern.permute.xlu0 0
    %27 = vperm.xlu0 %26, %v13
    %v28 = vpop.permute.xlu0 %27
    %vm29 = vcmp.eq.s32.totalorder %v25, %v28
    %v30 = vsel %vm29, %v12, 0.0
    %v31 = vsel %vm14, %v30, 0.0
    %32 = vadd.xlane.f32.xlu0 %v31
    %v33 = vpop.xlane.xlu0 %32
    %v34 = vsel %vm29, %v20, 0.0
    %v35 = vsel %vm14, %v34, 0.0
    %36 = vadd.xlane.f32.xlu0 %v35
    %v37 = vpop.xlane.xlu0 %36
    %v38 = vlog2.pop %v23
    %v39 = vmul.f32 %v38, 0.6931472
    %v40 = vadd.f32 %v17, %v39
    %v41 = vsub.f32 %v40, %v33
    %v42 = vmax.f32 %v41, 0.0
    %v43 = vrcp.pop %v23
    %v44 = vmul.f32 %v37, %v43
    %v45 = vsub.f32 1.0, %v44
    %v46 = vmul.f32 %v45, %v45
    %v47 = vmul.f32 %v46, %v42
    %s48 = smul.u32 0, 8
    %v49 = vlaneseq
    %v50 = vshrl.u32 %v49, 7
    %v51 = vstv %s48
    %v52 = vadd.s32 %v51, %v50
    %vm53 = vcmp.lt.s32.totalorder %v52, 8
    %v54 = vsel %vm53, %v47, 0.0
    %vm55 = vcmask 7168
    %v56 = vsel %vm55, %v54, 0.0
    %57 = vadd.xlane.f32.xlu0 %v56
    %v58 = vpop.xlane.xlu0 %57
    %v59 = vrot.slane %v58, 4
    %v60 = vadd.f32 %v58, %v59
    %v61 = vrot.slane %v60, 2
    %v62 = vadd.f32 %v60, %v61
    %v63 = vrot.slane %v62, 1
    %v64 = vadd.f32 %v62, %v63
    %s65 = vtos %v64
    %v66 = vstv %s65
    %67 = vst [vmem:[#allocation2] sm:$0xff] %v66
    // Predicated region
    $region10: #{tpu_custom_call.1} parent=1 // pred_check
      _
    $region11: #{tpu_custom_call.1} parent=1 // pred_check_branch
      %69 = sbr.rel (0) target = $region13
    $region12: #{tpu_custom_call.1} parent=1 // pred_region
      %s71 = ssub.s32 128, 128
      %72 = vsyncadd [#allocation3], %s71
      %s74 = sshll.u32 [#allocation2], 4
      %s75 = int_to_ptr.vmem [resolvable:$true] %s74
      %77 = dma.vmem_to_hbm [thread:$0]  %s75, 128, %s2, [#allocation3]
    $region13: #{tpu_custom_call.1} parent=1 // pred_fallthru
      _
    // Predicated region
    $region14: #{tpu_custom_call.1} parent=1 // pred_check
      _
    $region15: #{tpu_custom_call.1} parent=1 // pred_check_branch
      %79 = sbr.rel (0) target = $region17
    $region16: #{tpu_custom_call.1} parent=1 // pred_region
      %80 = dma.done [#allocation3], 128
    $region17: #{tpu_custom_call.1} parent=1 // pred_fallthru
      _
    %81 = vsyncpa [#allocation3], 1

</llo_original>
